<compile_context>
chip_gen: v6e
topology: v6e:2x2x1
jax: 0.10.0
libtpu: 0.0.40
codegen_flags: <defaults>
</compile_context>

<pallas_src>
import math
import functools

import jax
import jax.numpy as jnp
from jax.experimental import pallas as pl
from jax.experimental.pallas import tpu as pltpu


# Flip to jnp.bfloat16 on v6e/v7x for native-MXU throughput + halved weight/support DMA.
MM_DTYPE = jnp.float32
_VMEM_LIMIT_BYTES = 32 * 1024 * 1024   # above v5e's 16 MiB default, below v7x's 64 MiB physical


# ----------------------------------------------------------------------------
# In-kernel helpers
# ----------------------------------------------------------------------------
def _row_softmax(s):
    """Row-wise softmax; denominator via EUP reciprocal instead of an N^2 VALU divide."""
    s = s - jnp.max(s, axis=-1, keepdims=True)
    e = jnp.exp(s)
    return e * pl.reciprocal(jnp.sum(e, axis=-1, keepdims=True), approx=True)


# ----------------------------------------------------------------------------
# Pallas kernels
# ----------------------------------------------------------------------------
def _supports_mask_kernel(nsup_ref, temb_ref, emb_ref, mpool_ref, tpool_ref,
                          scale_ref, shift_ref, sup_ref, mask_ref, *,
                          hc_bias, gamma, zeta, inverse_mask, mm_dtype):
    """Per batch element: hard-concrete mask + combined masked support matrix."""
    f32 = jnp.float32
    t = temb_ref[0]                                                   # (window, N)
    tm = t.astype(mm_dtype)

    # time_supports = softmax(relu(T^T @ T), axis=-1)
    ts = jax.lax.dot_general(tm, tm, (((0,), (0,)), ((), ())),
                             preferred_element_type=f32)              # (N, N)
    ts = _row_softmax(jnp.maximum(ts, 0.0))

    # raw mask -> BatchNorm1d(eval, folded affine) -> hard concrete (eval).
    # Kept in f32 regardless of MM_DTYPE: the 0.5 rounding threshold is precision-sensitive.
    raw = jnp.dot(emb_ref[...].astype(f32), mpool_ref[...].astype(f32),
                  preferred_element_type=f32)                         # E @ mask_pool  (N, N)
    raw = raw + jax.lax.dot_general(t.astype(f32), tpool_ref[...].astype(f32),
                                    (((0,), (0,)), ((), ())),
                                    preferred_element_type=f32)       # T^T @ time_pool
    raw = raw * scale_ref[...] + shift_ref[...]
    s = jax.nn.sigmoid(raw + hc_bias) * (zeta - gamma) + gamma
    s = jnp.clip(s, 0.0, 1.0)
    # round() of a value clipped to [0,1] with half-to-even ties == (s > 0.5)
    mask = jnp.where(s > 0.5, 1.0, 0.0)
    if inverse_mask:
        mask = 1.0 - mask                                             # round(1 - binary) == 1 - binary
    mask_ref[0] = mask.astype(mask_ref.dtype)

    # (supports*mask + time_supports*mask) / 2  ==  0.5 * (supports + time_supports) * mask
    sup_ref[0] = (0.5 * (nsup_ref[...].astype(f32) + ts) * mask).astype(sup_ref.dtype)


def _supports_kernel(nsup_ref, temb_ref, sup_ref, *, mm_dtype):
    """Per batch element, explainability disabled: combined (unmasked) support matrix."""
    f32 = jnp.float32
    t = temb_ref[0].astype(mm_dtype)                                  # (window, N)
    ts = jax.lax.dot_general(t, t, (((0,), (0,)), ((), ())),
                             preferred_element_type=f32)
    ts = _row_softmax(jnp.maximum(ts, 0.0))
    sup_ref[0] = (0.5 * (nsup_ref[...].astype(f32) + ts)).astype(sup_ref.dtype)


def _fused_gate_kernel(x_ref, st_ref, sup_ref, emb_ref,
                       rwx0_ref, rws0_ref, rwx1_ref, rws1_ref, rb_ref,
                       uwx0_ref, uws0_ref, uwx1_ref, uws1_ref, ub_ref,
                       h_ref, *, dim_out, embed_dim, mm_dtype):
    """One grid step == one batch element of BOTH MaskGate calls + GRU combine.

    Per-node conv factorization (MXU-friendly):
        out[n, o] = bias[n, o] + sum_d emb[n, d] * Y[n, d*Dout + o]
        Y = x @ W0[:din] + state_term @ W0[din:] + (sup@x) @ W1[:din] + (sup@state_term) @ W1[din:]
    where W{0,1} are the (Din_total, embed_dim*Dout) reshaped weight pools (cheb order 0/1).
    """
    f32 = jnp.float32

    def mm(a, b):
        return jnp.dot(a.astype(mm_dtype), b.astype(mm_dtype),
                       preferred_element_type=f32)

    x = x_ref[0]                                                      # (N, dim_in)
    st = st_ref[0]                                                    # (N, dim_out)
    stf = st.astype(f32)
    sup = sup_ref[0]                                                  # (N, N) combined supports
    emb = emb_ref[...].astype(f32)                                    # (N, embed_dim)

    # k=1 chebyshev branch inputs (k=0 is identity @ [x | state] == [x | state]).
    xbx = mm(sup, x)                                                  # supports @ x      (N, dim_in)
    xbs = mm(sup, st)                                                 # supports @ state  (N, dim_out)

    # -------- reset gate: z_r (2*dim_out wide) ----------------------------------------
    do2 = 2 * dim_out
    y_r = (mm(x, rwx0_ref[...]) + mm(st, rws0_ref[...])
           + mm(xbx, rwx1_ref[...]) + mm(xbs, rws1_ref[...]))         # (N, embed_dim*2*dim_out)
    acc_r = rb_ref[...].astype(f32)
    for d in range(embed_dim):                                        # small static embed_dim
        acc_r = acc_r + emb[:, d:d + 1] * y_r[:, d * do2:(d + 1) * do2]
    z_r = jax.nn.sigmoid(acc_r)
    z = z_r[:, :dim_out]
    r = z_r[:, dim_out:]

    # -------- update gate on candidate = [x | z*state], formed entirely in VMEM -------
    zs = z * stf                                                      # (N, dim_out)
    xbz = mm(sup, zs)                                                 # supports @ (z*state)
    y_u = (mm(x, uwx0_ref[...]) + mm(zs, uws0_ref[...])
           + mm(xbx, uwx1_ref[...]) + mm(xbz, uws1_ref[...]))         # (N, embed_dim*dim_out)
    acc_u = ub_ref[...].astype(f32)
    for d in range(embed_dim):
        acc_u = acc_u + emb[:, d:d + 1] * y_u[:, d * dim_out:(d + 1) * dim_out]
    hc = jnp.tanh(acc_u)

    h_ref[0] = (r * stf + (1.0 - r) * hc).astype(h_ref.dtype)


# ----------------------------------------------------------------------------
# pallas_call wrappers
# ----------------------------------------------------------------------------
def compute_supports_and_mask(node_supports, time_emb, emb, mask_pool, time_pool,
                              scale, shift, *, inverse_mask, mm_dtype=MM_DTYPE):
    B, Tw, N = time_emb.shape
    kernel = functools.partial(_supports_mask_kernel, hc_bias=3.0, gamma=-0.2, zeta=1.0,
                               inverse_mask=inverse_mask, mm_dtype=mm_dtype)
    full2d = lambda arr: pl.BlockSpec(arr.shape, lambda b: (0, 0))
    return pl.pallas_call(
        kernel,
        out_shape=(jax.ShapeDtypeStruct((B, N, N), jnp.float32),   # combined masked supports
                   jax.ShapeDtypeStruct((B, N, N), jnp.float32)),  # binary hard-concrete mask
        grid_spec=pltpu.PrefetchScalarGridSpec(
            num_scalar_prefetch=0,
            grid=(B,),
            in_specs=[
                full2d(node_supports),                             # batch-invariant node supports
                pl.BlockSpec((1, Tw, N), lambda b: (b, 0, 0)),     # time embeddings
                full2d(emb),
                full2d(mask_pool),
                full2d(time_pool),
                full2d(scale),
                full2d(shift),
            ],
            out_specs=[pl.BlockSpec((1, N, N), lambda b: (b, 0, 0)),
                       pl.BlockSpec((1, N, N), lambda b: (b, 0, 0))],
        ),
        compiler_params=pltpu.CompilerParams(
            dimension_semantics=("parallel",),
            vmem_limit_bytes=_VMEM_LIMIT_BYTES),
    )(node_supports, time_emb, emb, mask_pool, time_pool, scale, shift)


def compute_supports(node_supports, time_emb, *, mm_dtype=MM_DTYPE):
    B, Tw, N = time_emb.shape
    kernel = functools.partial(_supports_kernel, mm_dtype=mm_dtype)
    return pl.pallas_call(
        kernel,
        out_shape=jax.ShapeDtypeStruct((B, N, N), jnp.float32),
        grid_spec=pltpu.PrefetchScalarGridSpec(
            num_scalar_prefetch=0,
            grid=(B,),
            in_specs=[
                pl.BlockSpec(node_supports.shape, lambda b: (0, 0)),
                pl.BlockSpec((1, Tw, N), lambda b: (b, 0, 0)),
            ],
            out_specs=pl.BlockSpec((1, N, N), lambda b: (b, 0, 0)),
        ),
        compiler_params=pltpu.CompilerParams(
            dimension_semantics=("parallel",),
            vmem_limit_bytes=_VMEM_LIMIT_BYTES),
    )(node_supports, time_emb)


def fused_gru_gates(x, state, supports, emb,
                    rwx0, rws0, rwx1, rws1, rb,
                    uwx0, uws0, uwx1, uws1, ub, *, mm_dtype=MM_DTYPE):
    B, N, dim_in = x.shape
    dim_out = state.shape[-1]
    embed_dim = emb.shape[-1]

    if mm_dtype != jnp.float32:
        # Pre-cast the heavy matmul operands so HBM/VMEM traffic is halved too.
        cast = lambda a: a.astype(mm_dtype)
        x, state, supports = cast(x), cast(state), cast(supports)
        rwx0, rws0, rwx1, rws1 = map(cast, (rwx0, rws0, rwx1, rws1))
        uwx0, uws0, uwx1, uws1 = map(cast, (uwx0, uws0, uwx1, uws1))

    full2d = lambda arr: pl.BlockSpec(arr.shape, lambda b: (0, 0))
    kernel = functools.partial(_fused_gate_kernel, dim_out=dim_out,
                               embed_dim=embed_dim, mm_dtype=mm_dtype)
    return pl.pallas_call(
        kernel,
        out_shape=jax.ShapeDtypeStruct((B, N, dim_out), jnp.float32),
        grid_spec=pltpu.PrefetchScalarGridSpec(
            num_scalar_prefetch=0,
            grid=(B,),
            in_specs=[
                pl.BlockSpec((1, N, dim_in), lambda b: (b, 0, 0)),    # x
                pl.BlockSpec((1, N, dim_out), lambda b: (b, 0, 0)),   # state
                pl.BlockSpec((1, N, N), lambda b: (b, 0, 0)),         # combined supports
                full2d(emb),
                full2d(rwx0), full2d(rws0), full2d(rwx1), full2d(rws1), full2d(rb),
                full2d(uwx0), full2d(uws0), full2d(uwx1), full2d(uws1), full2d(ub),
            ],
            out_specs=pl.BlockSpec((1, N, dim_out), lambda b: (b, 0, 0)),
        ),
        compiler_params=pltpu.CompilerParams(
            dimension_semantics=("parallel",),
            vmem_limit_bytes=_VMEM_LIMIT_BYTES),
    )(x, state, supports, emb, rwx0, rws0, rwx1, rws1, rb,
      uwx0, uws0, uwx1, uws1, ub)


# ----------------------------------------------------------------------------
# Plain-JAX glue: parameter setup + full MaskGCNLayer forward
# ----------------------------------------------------------------------------
def positional_encoding_table(d_model, max_len):
    position = jnp.arange(max_len, dtype=jnp.float32)[:, None]
    div_term = jnp.exp(jnp.arange(0, d_model, 2, dtype=jnp.float32)
                       * (-math.log(10000.0) / d_model))
    pe = jnp.zeros((max_len, d_model), jnp.float32)
    pe = pe.at[:, 0::2].set(jnp.sin(position * div_term))
    pe = pe.at[:, 1::2].set(jnp.cos(position * div_term))
    return pe


def init_params(key, dim_in, dim_out, cheb_k, embed_dim, num_nodes, window):
    keys = jax.random.split(key, 6)

    def rnd(k, shape, scale=0.1):
        return scale * jax.random.normal(k, shape, dtype=jnp.float32)

    din_total = dim_in + dim_out
    return dict(
        reset_weights_pool=rnd(keys[0], (embed_dim, cheb_k, din_total, 2 * dim_out)),
        reset_bias_pool=rnd(keys[1], (embed_dim, 2 * dim_out)),
        update_weights_pool=rnd(keys[2], (embed_dim, cheb_k, din_total, dim_out)),
        update_bias_pool=rnd(keys[3], (embed_dim, dim_out)),
        mask_pool=rnd(keys[4], (embed_dim, num_nodes)),
        time_pool=rnd(keys[5], (window, num_nodes)),
        bn_weight=jnp.ones((num_nodes,), jnp.float32),        # BatchNorm1d defaults
        bn_bias=jnp.zeros((num_nodes,), jnp.float32),
        bn_running_mean=jnp.zeros((num_nodes,), jnp.float32),
        bn_running_var=jnp.ones((num_nodes,), jnp.float32),
        pe=positional_encoding_table(embed_dim, window),
    )


def mask_gcn_layer_forward(params, x, state, weight_embeddings, time_embeddings, *,
                           enable_explainability, iteration, bern_key,
                           min_percentage_nodes=0.2, inverse_mask=False,
                           mm_dtype=MM_DTYPE):
    B, N, dim_in = x.shape
    dim_out = state.shape[-1]

    emb = (weight_embeddings + params['pe'][iteration]) if enable_explainability \
        else weight_embeddings

    # Batch-invariant node supports softmax(relu(E @ E^T), axis=1): computed exactly once per
    # forward (was recomputed per batch element inside both gate kernels before).  Tiny op; fed
    # to the supports kernel as a plain (N, N) input.
    node_supports = jax.nn.softmax(jnp.maximum(emb @ emb.T, 0.0), axis=1)

    if enable_explainability:
        eps = 1e-5
        inv_std = params['bn_weight'] / jnp.sqrt(params['bn_running_var'] + eps)
        scale = inv_std[:, None]
        shift = (params['bn_bias'] - params['bn_running_mean'] * inv_std)[:, None]

        supports, mask = compute_supports_and_mask(
            node_supports, time_embeddings, emb, params['mask_pool'], params['time_pool'],
            scale, shift, inverse_mask=inverse_mask, mm_dtype=mm_dtype)

        penalty = jnp.ones_like(mask)                          # eval-mode hard-concrete penalty
        active_nodes = jnp.mean(mask)
        prob_removes = jnp.minimum(min_percentage_nodes / active_nodes + 1e-8, 1.0)
        remove_probs = mask * prob_removes
        # TODO(synk): torch.bernoulli RNG stream cannot be matched; using jax.random.bernoulli.
        remove_random = jax.random.bernoulli(bern_key, remove_probs).astype(jnp.float32)
        reduced_mask = mask - remove_random
        penalty_norm = jnp.sum(mask > 0, axis=(1, 2)).astype(jnp.float32)
        mask_loss = jnp.sum(penalty * (reduced_mask > 0).astype(jnp.float32),
                            axis=(1, 2)) / (penalty_norm + 1e-8)
        remove_penalty = jnp.maximum(min_percentage_nodes / active_nodes - 1.0, 0.0)
        mask_loss = mask_loss + remove_penalty
    else:
        # No (B, N, N) ones mask ever enters a kernel on this path.
        supports = compute_supports(node_supports, time_embeddings, mm_dtype=mm_dtype)
        mask = jnp.ones((B, N, N), jnp.float32)                # API parity only
        mask_loss = jnp.zeros((B,), jnp.float32)

    # Weight-pool factorization (glue): reshape (D, 2, Din_total, Do) -> per-cheb-order
    # (Din_total, D*Do) laid out [i, d*Do + o], then split along Din_total into the x / state
    # halves so the kernel never needs an in-VMEM concatenation.  The huge per-node
    # (N, 2, Din, Do) weight tensor is never built.
    def factor_pool(wpool):
        D, _, din_t, do_g = wpool.shape
        w0 = jnp.transpose(wpool[:, 0], (1, 0, 2)).reshape(din_t, D * do_g)
        w1 = jnp.transpose(wpool[:, 1], (1, 0, 2)).reshape(din_t, D * do_g)
        return w0[:dim_in], w0[dim_in:], w1[:dim_in], w1[dim_in:]

    rwx0, rws0, rwx1, rws1 = factor_pool(params['reset_weights_pool'])
    uwx0, uws0, uwx1, uws1 = factor_pool(params['update_weights_pool'])
    rb = emb @ params['reset_bias_pool']                       # (N, 2*dim_out)
    ub = emb @ params['update_bias_pool']                      # (N, dim_out)

    h = fused_gru_gates(x, state, supports, emb,
                        rwx0, rws0, rwx1, rws1, rb,
                        uwx0, uws0, uwx1, uws1, ub, mm_dtype=mm_dtype)
    return h, mask, mask_loss


# ----------------------------------------------------------------------------
if __name__ == "__main__":
    B, N = 2, 16
    dim_in, dim_out = 4, 8
    cheb_k, embed_dim, window = 2, 8, 8
    iteration = 3

    key = jax.random.PRNGKey(0)
    k_param, k_x, k_state, k_emb, k_time, k_bern = jax.random.split(key, 6)

    params = init_params(k_param, dim_in, dim_out, cheb_k, embed_dim, N, window)
    x = jax.random.normal(k_x, (B, N, dim_in), jnp.float32)
    state = jax.random.normal(k_state, (B, N, dim_out), jnp.float32)
    weight_embeddings = jax.random.normal(k_emb, (N, embed_dim), jnp.float32)
    time_embeddings = jax.random.normal(k_time, (B, window, N), jnp.float32)

    h, mask, mask_loss = mask_gcn_layer_forward(
        params, x, state, weight_embeddings, time_embeddings,
        enable_explainability=True, iteration=iteration, bern_key=k_bern,
        min_percentage_nodes=0.2, inverse_mask=False)
    jax.block_until_ready((h, mask, mask_loss))
    assert h.shape == (B, N, dim_out)
    assert mask.shape == (B, N, N)
    assert mask_loss.shape == (B,)

    # Also exercise the explainability-disabled path (no mask tensor enters any kernel).
    h2, mask2, mask_loss2 = mask_gcn_layer_forward(
        params, x, state, weight_embeddings, time_embeddings,
        enable_explainability=False, iteration=iteration, bern_key=k_bern,
        min_percentage_nodes=0.2, inverse_mask=False)
    jax.block_until_ready((h2, mask2, mask_loss2))
    assert h2.shape == (B, N, dim_out)

    print("KERNEL_OK")
</pallas_src>

<mosaic_0001>
module attributes {stable_mosaic.version = 11 : i64} {
  func.func @_supports_mask_kernel(%arg0: i32, %arg1: memref<16x16xf32, #tpu.memory_space<vmem>>, %arg2: memref<1x8x16xf32, #tpu.memory_space<vmem>>, %arg3: memref<16x8xf32, #tpu.memory_space<vmem>>, %arg4: memref<8x16xf32, #tpu.memory_space<vmem>>, %arg5: memref<8x16xf32, #tpu.memory_space<vmem>>, %arg6: memref<16x1xf32, #tpu.memory_space<vmem>>, %arg7: memref<16x1xf32, #tpu.memory_space<vmem>>, %arg8: memref<1x16x16xf32, #tpu.memory_space<vmem>>, %arg9: memref<1x16x16xf32, #tpu.memory_space<vmem>>) attributes {dimension_semantics = [#tpu.dimension_semantics<parallel>], iteration_bounds = array<i64: 2>, scalar_prefetch = 0 : i64, scratch_operands = 0 : i64, tpu.core_type = #tpu.core_type<tc>, window_params = [{pipeline_mode = #tpu.pipeline_mode<synchronous>, transform_indices = @transform_0, window_bounds = array<i64: 16, 16>}, {transform_indices = @transform_1, window_bounds = array<i64: 1, 8, 16>}, {pipeline_mode = #tpu.pipeline_mode<synchronous>, transform_indices = @transform_2, window_bounds = array<i64: 16, 8>}, {pipeline_mode = #tpu.pipeline_mode<synchronous>, transform_indices = @transform_3, window_bounds = array<i64: 8, 16>}, {pipeline_mode = #tpu.pipeline_mode<synchronous>, transform_indices = @transform_4, window_bounds = array<i64: 8, 16>}, {pipeline_mode = #tpu.pipeline_mode<synchronous>, transform_indices = @transform_5, window_bounds = array<i64: 16, 1>}, {pipeline_mode = #tpu.pipeline_mode<synchronous>, transform_indices = @transform_6, window_bounds = array<i64: 16, 1>}, {transform_indices = @transform_7, window_bounds = array<i64: 1, 16, 16>}, {transform_indices = @transform_8, window_bounds = array<i64: 1, 16, 16>}]} {
    %c0 = arith.constant 0 : index
    %c0_0 = arith.constant 0 : index
    %c0_1 = arith.constant 0 : index
    %0 = vector.load %arg2[%c0, %c0_0, %c0_1] : memref<1x8x16xf32, #tpu.memory_space<vmem>>, vector<1x8x16xf32>
    %1 = vector.shape_cast %0 : vector<1x8x16xf32> to vector<8x16xf32>
    %cst = arith.constant dense<0.000000e+00> : vector<16x16xf32>
    %2 = tpu.matmul %1, %1, %cst {dimension_numbers = #tpu.dot_dimension_numbers<[0], [0], [1], [1], [0, 1, 1, 1], [], []>} : vector<8x16xf32>, vector<8x16xf32>, vector<16x16xf32> -> vector<16x16xf32>
    %cst_2 = arith.constant 0.000000e+00 : f32
    %3 = vector.broadcast %cst_2 : f32 to vector<16x16xf32>
    %4 = arith.maximumf %2, %3 : vector<16x16xf32>
    %cst_3 = arith.constant dense<0xFF800000> : vector<16xf32>
    %5 = vector.multi_reduction <maximumf>, %4, %cst_3 [1] : vector<16x16xf32> to vector<16xf32>
    %6 = vector.shape_cast %5 : vector<16xf32> to vector<16x1xf32>
    %7 = vector.broadcast %6 : vector<16x1xf32> to vector<16x16xf32>
    %8 = arith.subf %4, %7 : vector<16x16xf32>
    %9 = math.exp %8 : vector<16x16xf32>
    %cst_4 = arith.constant dense<0.000000e+00> : vector<16xf32>
    %10 = vector.multi_reduction <add>, %9, %cst_4 [1] : vector<16x16xf32> to vector<16xf32>
    %11 = vector.shape_cast %10 : vector<16xf32> to vector<16x1xf32>
    %12 = tpu.reciprocal %11 {approx = true} : vector<16x1xf32> -> vector<16x1xf32>
    %13 = vector.broadcast %12 : vector<16x1xf32> to vector<16x16xf32>
    %14 = arith.mulf %9, %13 : vector<16x16xf32>
    %c0_5 = arith.constant 0 : index
    %c0_6 = arith.constant 0 : index
    %15 = vector.load %arg3[%c0_5, %c0_6] : memref<16x8xf32, #tpu.memory_space<vmem>>, vector<16x8xf32>
    %c0_7 = arith.constant 0 : index
    %c0_8 = arith.constant 0 : index
    %16 = vector.load %arg4[%c0_7, %c0_8] : memref<8x16xf32, #tpu.memory_space<vmem>>, vector<8x16xf32>
    %cst_9 = arith.constant dense<0.000000e+00> : vector<16x16xf32>
    %17 = tpu.matmul %15, %16, %cst_9 {dimension_numbers = #tpu.dot_dimension_numbers<[1], [0], [0], [1], [0, 0, 1, 1], [], []>} : vector<16x8xf32>, vector<8x16xf32>, vector<16x16xf32> -> vector<16x16xf32>
    %c0_10 = arith.constant 0 : index
    %c0_11 = arith.constant 0 : index
    %18 = vector.load %arg5[%c0_10, %c0_11] : memref<8x16xf32, #tpu.memory_space<vmem>>, vector<8x16xf32>
    %cst_12 = arith.constant dense<0.000000e+00> : vector<16x16xf32>
    %19 = tpu.matmul %1, %18, %cst_12 {dimension_numbers = #tpu.dot_dimension_numbers<[0], [0], [1], [1], [0, 1, 1, 1], [], []>} : vector<8x16xf32>, vector<8x16xf32>, vector<16x16xf32> -> vector<16x16xf32>
    %20 = arith.addf %17, %19 : vector<16x16xf32>
    %c0_13 = arith.constant 0 : index
    %c0_14 = arith.constant 0 : index
    %21 = vector.load %arg6[%c0_13, %c0_14] : memref<16x1xf32, #tpu.memory_space<vmem>>, vector<16x1xf32>
    %22 = vector.broadcast %21 : vector<16x1xf32> to vector<16x16xf32>
    %23 = arith.mulf %20, %22 : vector<16x16xf32>
    %c0_15 = arith.constant 0 : index
    %c0_16 = arith.constant 0 : index
    %24 = vector.load %arg7[%c0_15, %c0_16] : memref<16x1xf32, #tpu.memory_space<vmem>>, vector<16x1xf32>
    %25 = vector.broadcast %24 : vector<16x1xf32> to vector<16x16xf32>
    %26 = arith.addf %23, %25 : vector<16x16xf32>
    %cst_17 = arith.constant 3.000000e+00 : f32
    %27 = vector.broadcast %cst_17 : f32 to vector<16x16xf32>
    %28 = arith.addf %26, %27 : vector<16x16xf32>
    %29 = arith.negf %28 : vector<16x16xf32>
    %30 = math.exp %29 : vector<16x16xf32>
    %cst_18 = arith.constant 1.000000e+00 : f32
    %31 = vector.broadcast %cst_18 : f32 to vector<16x16xf32>
    %32 = arith.addf %31, %30 : vector<16x16xf32>
    %33 = arith.divf %31, %32 : vector<16x16xf32>
    %cst_19 = arith.constant 1.200000e+00 : f32
    %34 = vector.broadcast %cst_19 : f32 to vector<16x16xf32>
    %35 = arith.mulf %33, %34 : vector<16x16xf32>
    %cst_20 = arith.constant -2.000000e-01 : f32
    %36 = vector.broadcast %cst_20 : f32 to vector<16x16xf32>
    %37 = arith.addf %35, %36 : vector<16x16xf32>
    %cst_21 = arith.constant 0.000000e+00 : f32
    %cst_22 = arith.constant 1.000000e+00 : f32
    %38 = vector.broadcast %cst_21 : f32 to vector<16x16xf32>
    %39 = arith.maximumf %38, %37 : vector<16x16xf32>
    %40 = vector.broadcast %cst_22 : f32 to vector<16x16xf32>
    %41 = arith.minimumf %40, %39 : vector<16x16xf32>
    %cst_23 = arith.constant 5.000000e-01 : f32
    %42 = vector.broadcast %cst_23 : f32 to vector<16x16xf32>
    %43 = arith.cmpf ogt, %41, %42 : vector<16x16xf32>
    %cst_24 = arith.constant 1.000000e+00 : f32
    %cst_25 = arith.constant 0.000000e+00 : f32
    %44 = vector.broadcast %cst_24 : f32 to vector<16x16xf32>
    %45 = vector.broadcast %cst_25 : f32 to vector<16x16xf32>
    %46 = arith.select %43, %44, %45 : vector<16x16xi1>, vector<16x16xf32>
    %c0_26 = arith.constant 0 : index
    %c0_27 = arith.constant 0 : index
    %c0_28 = arith.constant 0 : index
    %47 = vector.load %arg9[%c0_26, %c0_27, %c0_28] : memref<1x16x16xf32, #tpu.memory_space<vmem>>, vector<1x16x16xf32>
    %48 = vector.shape_cast %47 : vector<1x16x16xf32> to vector<16x16xf32>
    %49 = vector.shape_cast %46 : vector<16x16xf32> to vector<1x16x16xf32>
    tpu.vector_store %arg9[%c0_26, %c0_27, %c0_28], %49 {strides = array<i32>} : memref<1x16x16xf32, #tpu.memory_space<vmem>>, vector<1x16x16xf32>,
    %c0_29 = arith.constant 0 : index
    %c0_30 = arith.constant 0 : index
    %50 = vector.load %arg1[%c0_29, %c0_30] : memref<16x16xf32, #tpu.memory_space<vmem>>, vector<16x16xf32>
    %51 = arith.addf %50, %14 : vector<16x16xf32>
    %cst_31 = arith.constant 5.000000e-01 : f32
    %52 = vector.broadcast %cst_31 : f32 to vector<16x16xf32>
    %53 = arith.mulf %52, %51 : vector<16x16xf32>
    %54 = arith.mulf %53, %46 : vector<16x16xf32>
    %c0_32 = arith.constant 0 : index
    %c0_33 = arith.constant 0 : index
    %c0_34 = arith.constant 0 : index
    %55 = vector.load %arg8[%c0_32, %c0_33, %c0_34] : memref<1x16x16xf32, #tpu.memory_space<vmem>>, vector<1x16x16xf32>
    %56 = vector.shape_cast %55 : vector<1x16x16xf32> to vector<16x16xf32>
    %57 = vector.shape_cast %54 : vector<16x16xf32> to vector<1x16x16xf32>
    tpu.vector_store %arg8[%c0_32, %c0_33, %c0_34], %57 {strides = array<i32>} : memref<1x16x16xf32, #tpu.memory_space<vmem>>, vector<1x16x16xf32>,
    return
  }
  func.func @transform_0(%arg0: i32) -> (i32, i32) {
    %c0_i32 = arith.constant 0 : i32
    %c0_i32_0 = arith.constant 0 : i32
    %c0_i32_1 = arith.constant 0 : i32
    return %c0_i32, %c0_i32_0 : i32, i32
  }
  func.func @transform_1(%arg0: i32) -> (i32, i32, i32) {
    %c0_i32 = arith.constant 0 : i32
    %c0_i32_0 = arith.constant 0 : i32
    %c0_i32_1 = arith.constant 0 : i32
    return %arg0, %c0_i32, %c0_i32_0 : i32, i32, i32
  }
  func.func @transform_2(%arg0: i32) -> (i32, i32) {
    %c0_i32 = arith.constant 0 : i32
    %c0_i32_0 = arith.constant 0 : i32
    %c0_i32_1 = arith.constant 0 : i32
    return %c0_i32, %c0_i32_0 : i32, i32
  }
  func.func @transform_3(%arg0: i32) -> (i32, i32) {
    %c0_i32 = arith.constant 0 : i32
    %c0_i32_0 = arith.constant 0 : i32
    %c0_i32_1 = arith.constant 0 : i32
    return %c0_i32, %c0_i32_0 : i32, i32
  }
  func.func @transform_4(%arg0: i32) -> (i32, i32) {
    %c0_i32 = arith.constant 0 : i32
    %c0_i32_0 = arith.constant 0 : i32
    %c0_i32_1 = arith.constant 0 : i32
    return %c0_i32, %c0_i32_0 : i32, i32
  }
  func.func @transform_5(%arg0: i32) -> (i32, i32) {
    %c0_i32 = arith.constant 0 : i32
    %c0_i32_0 = arith.constant 0 : i32
    %c0_i32_1 = arith.constant 0 : i32
    return %c0_i32, %c0_i32_0 : i32, i32
  }
  func.func @transform_6(%arg0: i32) -> (i32, i32) {
    %c0_i32 = arith.constant 0 : i32
    %c0_i32_0 = arith.constant 0 : i32
    %c0_i32_1 = arith.constant 0 : i32
    return %c0_i32, %c0_i32_0 : i32, i32
  }
  func.func @transform_7(%arg0: i32) -> (i32, i32, i32) {
    %c0_i32 = arith.constant 0 : i32
    %c0_i32_0 = arith.constant 0 : i32
    %c0_i32_1 = arith.constant 0 : i32
    return %arg0, %c0_i32, %c0_i32_0 : i32, i32, i32
  }
  func.func @transform_8(%arg0: i32) -> (i32, i32, i32) {
    %c0_i32 = arith.constant 0 : i32
    %c0_i32_0 = arith.constant 0 : i32
    %c0_i32_1 = arith.constant 0 : i32
    return %arg0, %c0_i32, %c0_i32_0 : i32, i32, i32
  }
}

</mosaic_0001>

<llo_original>
// kernel: tpu_custom_call.1
$region0: #{tpu_custom_call.1}
  #allocation0 [shape = 'u32[]', space=smem, size = 0x4, offset = 0x4, fixed_abs, tag = 'smem constant byte address 0x4 - core index']
  #allocation1 [shape = 'u32[144,128]{1,0:T(1,128)}', space=vmem, size = 0x12000, scoped, tag = 'internal scratch']
  %s0 = inlined_call_operand.vmem [shape: f32[16,16], index: 0, kind: input, shape index: {}]
  %s1 = inlined_call_operand.vmem [shape: f32[2,8,16], index: 1, kind: input, shape index: {}]
  %s2 = inlined_call_operand.vmem [shape: f32[16,8], index: 2, kind: input, shape index: {}]
  %s3 = inlined_call_operand.vmem [shape: f32[8,16], index: 3, kind: input, shape index: {}]
  %s4 = inlined_call_operand.vmem [shape: f32[8,16], index: 4, kind: input, shape index: {}]
  %s5 = inlined_call_operand.vmem [shape: f32[16,1], index: 5, kind: input, shape index: {}]
  %s6 = inlined_call_operand.vmem [shape: f32[16,1], index: 6, kind: input, shape index: {}]
  %s7 = inlined_call_operand.hbm [shape: f32[2,16,16], index: 7, kind: output, shape index: {0}]
  %s8 = inlined_call_operand.hbm [shape: f32[2,16,16], index: 8, kind: output, shape index: {1}]
  %9 = xla_tuple %s7, %s8
  %s10 = sld [smem:[#allocation0]]
  $region69: #{tpu_custom_call.1} parent=0
    _
  %s12 = ssub.s32 1, %s10
  %s13 = scalar_select 0, %s12, %s10
  $region1: #{tpu_custom_call.1} parent=0
    #allocation2 [shape = 'u8[16384]{0}', space=vmem, size = 0x4000, scoped, tag = 'output window, operand 0']
    #allocation3 [shape = 's32[2]{0}', space=sflag, size = 0x8, scoped, tag = 'scoped memory for tpu_custom_call.1']
    #allocation4 [shape = 'u8[16384]{0}', space=vmem, size = 0x4000, scoped, tag = 'output window, operand 1']
    #allocation5 [shape = 's32[2]{0}', space=sflag, size = 0x8, scoped, tag = 'scoped memory for tpu_custom_call.1']
    %14 = vsyncpa [#allocation3], 0
    %s15 = scalar_lea.sflag [#allocation3], 1
    %16 = vsyncpa %s15, 0
    %17 = vsyncpa [#allocation5], 0
    %s18 = scalar_lea.sflag [#allocation5], 1
    %19 = vsyncpa %s18, 0
    loop: start=0, step=1, limit=4
    $region2: #{tpu_custom_call.1} parent=1 // loop_pre_header
      _
    $region3: #{tpu_custom_call.1} parent=1 // loop_header
      %s21 = sphi 0, %s25
      %p22 = scmp.ge.s32.totalorder %s21, 4
      %s29 = sphi 0, %s29
      %s31 = sphi 0, %s29
      %s32 = sphi 0, %s31
      %s46 = sphi 0, %s32
      %s52 = sphi 0, %s54
      %s55 = sphi 0, %s52
      %s56 = sphi 0, %s55
      %s72 = sphi 0, %s56
      %s76 = sphi 0, %s76
      %s78 = sphi 0, %s76
      %s79 = sphi 0, %s78
      %s93 = sphi 0, %s79
      %s97 = sphi 0, %s97
      %s99 = sphi 0, %s97
      %s100 = sphi 0, %s99
      %s114 = sphi 0, %s100
      %s118 = sphi 0, %s118
      %s120 = sphi 0, %s118
      %s121 = sphi 0, %s120
      %s135 = sphi 0, %s121
      %s139 = sphi 0, %s139
      %s141 = sphi 0, %s139
      %s142 = sphi 0, %s141
      %s156 = sphi 0, %s142
      %s160 = sphi 0, %s160
      %s162 = sphi 0, %s160
      %s163 = sphi 0, %s162
      %s177 = sphi 0, %s163
      %s183 = sphi 0, %s185
      %s186 = sphi 0, %s183
      %s187 = sphi 0, %s186
      %s203 = sphi 0, %s187
      %s209 = sphi 0, %s211
      %s212 = sphi 0, %s209
      %s213 = sphi 0, %s212
      %s229 = sphi 0, %s213
    $region4: #{tpu_custom_call.1} parent=1 // loop_header_branch
      %24 = sbr.rel (%p22) target = $region8
    $region5: #{tpu_custom_call.1} parent=1 // loop_body
      %s26 = ssub.s32 %s21, 1
      %s27 = ssub.s32 %s21, 2
      %s28 = sadd.s32 %s21, 1
      %s30 = sadd.s32 %s29, 1
      %p33 = scmp.eq.s32.totalorder %s21, 1
      %p34 = scmp.ne.s32.totalorder %s29, %s31
      %p35 = scmp.eq.s32.totalorder %s21, 0
      %p36 = por %p34, %p35
      %p37 = scmp.ne.s32.totalorder %s29, %s31
      %p38 = scmp.eq.s32.totalorder %s26, 1
      %p39 = por %p37, %p38
      %p40 = scmp.ne.s32.totalorder %s31, %s32
      %p41 = scmp.eq.s32.totalorder %s26, 0
      %p42 = por %p40, %p41
      %p43 = scmp.ne.s32.totalorder %s31, %s32
      %p44 = scmp.eq.s32.totalorder %s27, 1
      %p45 = por %p43, %p44
      %p47 = scmp.ne.s32.totalorder %s32, %s46
      %p48 = scmp.eq.s32.totalorder %s27, 0
      %p49 = por %p47, %p48
      %s50 = ssub.s32 %s21, %s28
      %p51 = scmp.eq.s32.totalorder %s50, 0
      %s53 = sadd.s32 %s52, 1
      %s54 = scalar_select %p51, %s52, %s53
      %p57 = pneg %p51
      %p58 = scmp.eq.s32.totalorder %s21, 1
      %p59 = por %p57, %p58
      %p60 = scmp.ne.s32.totalorder %s52, %s55
      %p61 = scmp.eq.s32.totalorder %s21, 0
      %p62 = por %p60, %p61
      %p63 = scmp.ne.s32.totalorder %s52, %s55
      %p64 = scmp.eq.s32.totalorder %s26, 1
      %p65 = por %p63, %p64
      %p66 = scmp.ne.s32.totalorder %s55, %s56
      %p67 = scmp.eq.s32.totalorder %s26, 0
      %p68 = por %p66, %p67
      %p69 = scmp.ne.s32.totalorder %s55, %s56
      %p70 = scmp.eq.s32.totalorder %s27, 1
      %p71 = por %p69, %p70
      %p73 = scmp.ne.s32.totalorder %s56, %s72
      %p74 = scmp.eq.s32.totalorder %s27, 0
      %p75 = por %p73, %p74
      %s77 = sadd.s32 %s76, 1
      %p80 = scmp.eq.s32.totalorder %s21, 1
      %p81 = scmp.ne.s32.totalorder %s76, %s78
      %p82 = scmp.eq.s32.totalorder %s21, 0
      %p83 = por %p81, %p82
      %p84 = scmp.ne.s32.totalorder %s76, %s78
      %p85 = scmp.eq.s32.totalorder %s26, 1
      %p86 = por %p84, %p85
      %p87 = scmp.ne.s32.totalorder %s78, %s79
      %p88 = scmp.eq.s32.totalorder %s26, 0
      %p89 = por %p87, %p88
      %p90 = scmp.ne.s32.totalorder %s78, %s79
      %p91 = scmp.eq.s32.totalorder %s27, 1
      %p92 = por %p90, %p91
      %p94 = scmp.ne.s32.totalorder %s79, %s93
      %p95 = scmp.eq.s32.totalorder %s27, 0
      %p96 = por %p94, %p95
      %s98 = sadd.s32 %s97, 1
      %p101 = scmp.eq.s32.totalorder %s21, 1
      %p102 = scmp.ne.s32.totalorder %s97, %s99
      %p103 = scmp.eq.s32.totalorder %s21, 0
      %p104 = por %p102, %p103
      %p105 = scmp.ne.s32.totalorder %s97, %s99
      %p106 = scmp.eq.s32.totalorder %s26, 1
      %p107 = por %p105, %p106
      %p108 = scmp.ne.s32.totalorder %s99, %s100
      %p109 = scmp.eq.s32.totalorder %s26, 0
      %p110 = por %p108, %p109
      %p111 = scmp.ne.s32.totalorder %s99, %s100
      %p112 = scmp.eq.s32.totalorder %s27, 1
      %p113 = por %p111, %p112
      %p115 = scmp.ne.s32.totalorder %s100, %s114
      %p116 = scmp.eq.s32.totalorder %s27, 0
      %p117 = por %p115, %p116
      %s119 = sadd.s32 %s118, 1
      %p122 = scmp.eq.s32.totalorder %s21, 1
      %p123 = scmp.ne.s32.totalorder %s118, %s120
      %p124 = scmp.eq.s32.totalorder %s21, 0
      %p125 = por %p123, %p124
      %p126 = scmp.ne.s32.totalorder %s118, %s120
      %p127 = scmp.eq.s32.totalorder %s26, 1
      %p128 = por %p126, %p127
      %p129 = scmp.ne.s32.totalorder %s120, %s121
      %p130 = scmp.eq.s32.totalorder %s26, 0
      %p131 = por %p129, %p130
      %p132 = scmp.ne.s32.totalorder %s120, %s121
      %p133 = scmp.eq.s32.totalorder %s27, 1
      %p134 = por %p132, %p133
      %p136 = scmp.ne.s32.totalorder %s121, %s135
      %p137 = scmp.eq.s32.totalorder %s27, 0
      %p138 = por %p136, %p137
      %s140 = sadd.s32 %s139, 1
      %p143 = scmp.eq.s32.totalorder %s21, 1
      %p144 = scmp.ne.s32.totalorder %s139, %s141
      %p145 = scmp.eq.s32.totalorder %s21, 0
      %p146 = por %p144, %p145
      %p147 = scmp.ne.s32.totalorder %s139, %s141
      %p148 = scmp.eq.s32.totalorder %s26, 1
      %p149 = por %p147, %p148
      %p150 = scmp.ne.s32.totalorder %s141, %s142
      %p151 = scmp.eq.s32.totalorder %s26, 0
      %p152 = por %p150, %p151
      %p153 = scmp.ne.s32.totalorder %s141, %s142
      %p154 = scmp.eq.s32.totalorder %s27, 1
      %p155 = por %p153, %p154
      %p157 = scmp.ne.s32.totalorder %s142, %s156
      %p158 = scmp.eq.s32.totalorder %s27, 0
      %p159 = por %p157, %p158
      %s161 = sadd.s32 %s160, 1
      %p164 = scmp.eq.s32.totalorder %s21, 1
      %p165 = scmp.ne.s32.totalorder %s160, %s162
      %p166 = scmp.eq.s32.totalorder %s21, 0
      %p167 = por %p165, %p166
      %p168 = scmp.ne.s32.totalorder %s160, %s162
      %p169 = scmp.eq.s32.totalorder %s26, 1
      %p170 = por %p168, %p169
      %p171 = scmp.ne.s32.totalorder %s162, %s163
      %p172 = scmp.eq.s32.totalorder %s26, 0
      %p173 = por %p171, %p172
      %p174 = scmp.ne.s32.totalorder %s162, %s163
      %p175 = scmp.eq.s32.totalorder %s27, 1
      %p176 = por %p174, %p175
      %p178 = scmp.ne.s32.totalorder %s163, %s177
      %p179 = scmp.eq.s32.totalorder %s27, 0
      %p180 = por %p178, %p179
      %s181 = ssub.s32 %s21, %s28
      %p182 = scmp.eq.s32.totalorder %s181, 0
      %s184 = sadd.s32 %s183, 1
      %s185 = scalar_select %p182, %s183, %s184
      %p188 = pneg %p182
      %p189 = scmp.eq.s32.totalorder %s21, 1
      %p190 = por %p188, %p189
      %p191 = scmp.ne.s32.totalorder %s183, %s186
      %p192 = scmp.eq.s32.totalorder %s21, 0
      %p193 = por %p191, %p192
      %p194 = scmp.ne.s32.totalorder %s183, %s186
      %p195 = scmp.eq.s32.totalorder %s26, 1
      %p196 = por %p194, %p195
      %p197 = scmp.ne.s32.totalorder %s186, %s187
      %p198 = scmp.eq.s32.totalorder %s26, 0
      %p199 = por %p197, %p198
      %p200 = scmp.ne.s32.totalorder %s186, %s187
      %p201 = scmp.eq.s32.totalorder %s27, 1
      %p202 = por %p200, %p201
      %p204 = scmp.ne.s32.totalorder %s187, %s203
      %p205 = scmp.eq.s32.totalorder %s27, 0
      %p206 = por %p204, %p205
      %s207 = ssub.s32 %s21, %s28
      %p208 = scmp.eq.s32.totalorder %s207, 0
      %s210 = sadd.s32 %s209, 1
      %s211 = scalar_select %p208, %s209, %s210
      %p214 = pneg %p208
      %p215 = scmp.eq.s32.totalorder %s21, 1
      %p216 = por %p214, %p215
      %p217 = scmp.ne.s32.totalorder %s209, %s212
      %p218 = scmp.eq.s32.totalorder %s21, 0
      %p219 = por %p217, %p218
      %p220 = scmp.ne.s32.totalorder %s209, %s212
      %p221 = scmp.eq.s32.totalorder %s26, 1
      %p222 = por %p220, %p221
      %p223 = scmp.ne.s32.totalorder %s212, %s213
      %p224 = scmp.eq.s32.totalorder %s26, 0
      %p225 = por %p223, %p224
      %p226 = scmp.ne.s32.totalorder %s212, %s213
      %p227 = scmp.eq.s32.totalorder %s27, 1
      %p228 = por %p226, %p227
      %p230 = scmp.ne.s32.totalorder %s213, %s229
      %p231 = scmp.eq.s32.totalorder %s27, 0
      %p232 = por %p230, %p231
      %p233 = scmp.le.s32.totalorder 1, %s21
      %p234 = scmp.lt.s32.totalorder %s21, 3
      %p235 = pnand %p233, %p234
      %p236 = pneg %p235
      // Predicated region
      $region9: #{tpu_custom_call.1} parent=5 // pred_check
        _
      $region10: #{tpu_custom_call.1} parent=5 // pred_check_branch
        %238 = sbr.rel (%p235) target = $region12
      $region11: #{tpu_custom_call.1} parent=5 // pred_region
        %s239 = ssub.s32 %s21, 1
        // Predicated region
        $region13: #{tpu_custom_call.1} parent=11 // pred_check
          %p240 = pneg %p42
        $region14: #{tpu_custom_call.1} parent=11 // pred_check_branch
          %242 = sbr.rel (%p240) target = $region16
        $region15: #{tpu_custom_call.1} parent=11 // pred_region
          _
        $region16: #{tpu_custom_call.1} parent=11 // pred_fallthru
          _
        // Predicated region
        $region17: #{tpu_custom_call.1} parent=11 // pred_check
          %p243 = pneg %p89
        $region18: #{tpu_custom_call.1} parent=11 // pred_check_branch
          %245 = sbr.rel (%p243) target = $region20
        $region19: #{tpu_custom_call.1} parent=11 // pred_region
          _
        $region20: #{tpu_custom_call.1} parent=11 // pred_fallthru
          _
        // Predicated region
        $region21: #{tpu_custom_call.1} parent=11 // pred_check
          %p246 = pneg %p110
        $region22: #{tpu_custom_call.1} parent=11 // pred_check_branch
          %248 = sbr.rel (%p246) target = $region24
        $region23: #{tpu_custom_call.1} parent=11 // pred_region
          _
        $region24: #{tpu_custom_call.1} parent=11 // pred_fallthru
          _
        // Predicated region
        $region25: #{tpu_custom_call.1} parent=11 // pred_check
          %p249 = pneg %p131
        $region26: #{tpu_custom_call.1} parent=11 // pred_check_branch
          %251 = sbr.rel (%p249) target = $region28
        $region27: #{tpu_custom_call.1} parent=11 // pred_region
          _
        $region28: #{tpu_custom_call.1} parent=11 // pred_fallthru
          _
        // Predicated region
        $region29: #{tpu_custom_call.1} parent=11 // pred_check
          %p252 = pneg %p152
        $region30: #{tpu_custom_call.1} parent=11 // pred_check_branch
          %254 = sbr.rel (%p252) target = $region32
        $region31: #{tpu_custom_call.1} parent=11 // pred_region
          _
        $region32: #{tpu_custom_call.1} parent=11 // pred_fallthru
          _
        // Predicated region
        $region33: #{tpu_custom_call.1} parent=11 // pred_check
          %p255 = pneg %p173
        $region34: #{tpu_custom_call.1} parent=11 // pred_check_branch
          %257 = sbr.rel (%p255) target = $region36
        $region35: #{tpu_custom_call.1} parent=11 // pred_region
          _
        $region36: #{tpu_custom_call.1} parent=11 // pred_fallthru
          _
      $region12: #{tpu_custom_call.1} parent=5 // pred_fallthru
        _
      %p258 = scmp.lt.s32.totalorder %s21, 2
      // Predicated region
      $region37: #{tpu_custom_call.1} parent=5 // pred_check
        %p259 = pneg %p258
      $region38: #{tpu_custom_call.1} parent=5 // pred_check_branch
        %261 = sbr.rel (%p259) target = $region40
      $region39: #{tpu_custom_call.1} parent=5 // pred_region
        // Predicated region
        $region41: #{tpu_custom_call.1} parent=39 // pred_check
          %p262 = pneg %p62
        $region42: #{tpu_custom_call.1} parent=39 // pred_check_branch
          %264 = sbr.rel (%p262) target = $region44
        $region43: #{tpu_custom_call.1} parent=39 // pred_region
          %p265 = scmp.lt.s32.totalorder %s21, 1
          %s266 = scalar_select %p265, %s21, 1
          %s267 = smul.addr %s266, 8
          %s268 = scalar_lea.vmem %s1, %s267
        $region44: #{tpu_custom_call.1} parent=39 // pred_fallthru
          _
      $region40: #{tpu_custom_call.1} parent=5 // pred_fallthru
        _
      %p269 = scmp.le.s32.totalorder 1, %s21
      %p270 = scmp.lt.s32.totalorder %s21, 3
      %p271 = pnand %p269, %p270
      %p272 = pneg %p271
      // Predicated region
      $region45: #{tpu_custom_call.1} parent=5 // pred_check
        _
      $region46: #{tpu_custom_call.1} parent=5 // pred_check_branch
        %274 = sbr.rel (%p271) target = $region48
      $region47: #{tpu_custom_call.1} parent=5 // pred_region
        %s275 = ssub.s32 %s21, 1
        %p276 = pneg %p42
        %p277 = pneg %p39
        %p278 = scmp.lt.s32.totalorder %s26, 1
        %s279 = scalar_select %p278, %s26, 1
        %s280 = smul.addr %s279, 8
        %s281 = scalar_lea.vmem %s1, %s280
        %p282 = pneg %p68
        %p283 = pneg %p65
        %p284 = pneg %p89
        %p285 = pneg %p86
        %p286 = pneg %p110
        %p287 = pneg %p107
        %p288 = pneg %p131
        %p289 = pneg %p128
        %p290 = pneg %p152
        %p291 = pneg %p149
        %p292 = pneg %p173
        %p293 = pneg %p170
        %p294 = pneg %p199
        %p295 = pneg %p196
        %s296 = sand.u32 %s186, 1
        %s297 = scalar_lea.sflag [#allocation3], %s296
        %s298 = sand.u32 %s186, 1
        %s299 = smul.addr %s298, 16
        %s300 = scalar_lea.vmem [#allocation2], %s299
        %p301 = pneg %p225
        %p302 = pneg %p222
        %s303 = sand.u32 %s212, 1
        %s304 = scalar_lea.sflag [#allocation5], %s303
        %s305 = sand.u32 %s212, 1
        %s306 = smul.addr %s305, 16
        %s307 = scalar_lea.vmem [#allocation4], %s306
        %p308 = scmp.lt.s32.totalorder %s26, 1
        %s309 = scalar_select %p308, %s26, 1
        %s310 = smul.addr %s309, 8
        %s311 = scalar_lea.vmem %s1, %s310
        %v312 = vld [vmem:[%s311] sm:$0xff]
        %313 = vxpose.xlu0.b32.start [1/16] %v312, 128
        %314 = vxpose.xlu0.b32.cont [2/16] 0.0, 128
        %315 = vxpose.xlu0.b32.cont [3/16] 0.0, 128
        %316 = vxpose.xlu0.b32.cont [4/16] 0.0, 128
        %317 = vxpose.xlu0.b32.cont [5/16] 0.0, 128
        %318 = vxpose.xlu0.b32.cont [6/16] 0.0, 128
        %319 = vxpose.xlu0.b32.cont [7/16] 0.0, 128
        %320 = vxpose.xlu0.b32.cont [8/16] 0.0, 128
        %321 = vxpose.xlu0.b32.cont [9/16] 0.0, 128
        %322 = vxpose.xlu0.b32.cont [10/16] 0.0, 128
        %323 = vxpose.xlu0.b32.cont [11/16] 0.0, 128
        %324 = vxpose.xlu0.b32.cont [12/16] 0.0, 128
        %325 = vxpose.xlu0.b32.cont [13/16] 0.0, 128
        %326 = vxpose.xlu0.b32.cont [14/16] 0.0, 128
        %327 = vxpose.xlu0.b32.cont [15/16] 0.0, 128
        %328 = vxpose.xlu0.b32.end [16/16] 0.0, 128
        %v329 = vpop.trf.xlu0
        %v330 = vpop.trf.xlu0
        %v331 = vpop.trf.xlu0
        %v332 = vpop.trf.xlu0
        %v333 = vpop.trf.xlu0
        %v334 = vpop.trf.xlu0
        %v335 = vpop.trf.xlu0
        %v336 = vpop.trf.xlu0
        %v337 = vpop.trf.xlu0
        %v338 = vpop.trf.xlu0
        %v339 = vpop.trf.xlu0
        %v340 = vpop.trf.xlu0
        %v341 = vpop.trf.xlu0
        %v342 = vpop.trf.xlu0
        %v343 = vpop.trf.xlu0
        %v344 = vpop.trf.xlu0
        %vm345 = vcmask 64512
        %v347 = vsel %vm345, %v329, 0
        %v350 = vsel %vm345, %v330, 0
        %352 = vmatprep.subr.mxu0 0.0
        %353 = vmatpush1.msra.mxu0 0.0
        %354 = vmatprep.subr.mxu0 0.0
        %355 = vmatpush1.msra.mxu0 0.0
        %356 = vmatprep.subr.mxu0 0.0
        %357 = vmatpush1.msra.mxu0 0.0
        %358 = vmatprep.subr.mxu0 0.0
        %359 = vmatpush1.msra.mxu0 0.0
        %360 = vmatprep.subr.mxu0 0.0
        %361 = vmatpush1.msra.mxu0 0.0
        %362 = vmatprep.subr.mxu0 0.0
        %363 = vmatpush1.msra.mxu0 0.0
        %364 = vmatprep.subr.mxu0 0.0
        %365 = vmatpush1.msra.mxu0 0.0
        %366 = vmatprep.subr.mxu0 0.0
        %367 = vmatpush1.msra.mxu0 0.0
        %368 = vmatprep.subr.mxu0 0.0
        %369 = vmatpush1.msra.mxu0 0.0
        %370 = vmatprep.subr.mxu0 0.0
        %371 = vmatpush1.msra.mxu0 0.0
        %372 = vmatprep.subr.mxu0 0.0
        %373 = vmatpush1.msra.mxu0 0.0
        %374 = vmatprep.subr.mxu0 0.0
        %375 = vmatpush1.msra.mxu0 0.0
        %376 = vmatprep.subr.mxu0 0.0
        %377 = vmatpush1.msra.mxu0 0.0
        %378 = vmatprep.subr.mxu0 0.0
        %379 = vmatpush1.msra.mxu0 0.0
        %380 = vmatprep.subr.mxu0 0.0
        %381 = vmatpush1.msra.mxu0 0.0
        %382 = vmatprep.subr.mxu0 0.0
        %383 = vmatpush1.msra.mxu0 %v312
        %384 = vmatprep.subr.mxu0 0.0
        %385 = vmatpush2.msra.mxu0 0.0
        %386 = vmatprep.subr.mxu0 0.0
        %387 = vmatpush2.msra.mxu0 0.0
        %388 = vmatprep.subr.mxu0 0.0
        %389 = vmatpush2.msra.mxu0 0.0
        %390 = vmatprep.subr.mxu0 0.0
        %391 = vmatpush2.msra.mxu0 0.0
        %392 = vmatprep.subr.mxu0 0.0
        %393 = vmatpush2.msra.mxu0 0.0
        %394 = vmatprep.subr.mxu0 0.0
        %395 = vmatpush2.msra.mxu0 0.0
        %396 = vmatprep.subr.mxu0 0.0
        %397 = vmatpush2.msra.mxu0 0.0
        %398 = vmatprep.subr.mxu0 0.0
        %399 = vmatpush2.msra.mxu0 0.0
        %400 = vmatprep.subr.mxu0 0.0
        %401 = vmatpush2.msra.mxu0 0.0
        %402 = vmatprep.subr.mxu0 0.0
        %403 = vmatpush2.msra.mxu0 0.0
        %404 = vmatprep.subr.mxu0 0.0
        %405 = vmatpush2.msra.mxu0 0.0
        %406 = vmatprep.subr.mxu0 0.0
        %407 = vmatpush2.msra.mxu0 0.0
        %408 = vmatprep.subr.mxu0 0.0
        %409 = vmatpush2.msra.mxu0 0.0
        %410 = vmatprep.subr.mxu0 0.0
        %411 = vmatpush2.msra.mxu0 0.0
        %412 = vmatprep.subr.mxu0 0.0
        %413 = vmatpush2.msra.mxu0 0.0
        %414 = vmatprep.subr.mxu0 0.0
        %415 = vmatpush2.msra.mxu0 0.0
        %416 = vmatprep.mubr.f32.mxu0 0.0
        %417 = vmatmul.mubr.f32.gmra.mxu0 %v347
        %v418 = vpop.f32.mrf.mxu0
        %v419 = vadd.f32 0.0, %v418
        %v420 = vpop.f32.mrf.mxu0
        %421 = vmatprep.mubr.f32.mxu0 0.0
        %422 = vmatmul.mubr.f32.gmra.mxu0 %v350
        %v423 = vpop.f32.mrf.mxu0
        %v424 = vadd.f32 0.0, %v423
        %v425 = vpop.f32.mrf.mxu0
        %426 = vdwg.mxu0
        %v427 = vmax.f32 %v419, 0.0
        %v428 = vmax.f32 %v424, 0.0
        %vm429 = vcmask 130048
        %v430 = vsel %vm429, %v427, -inf
        %431 = vmax.xlane.f32.xlu0 %v430
        %v432 = vpop.xlane.xlu0 %431
        %v433 = vsel %vm429, %v428, -inf
        %434 = vmax.xlane.f32.xlu0 %v433
        %v435 = vpop.xlane.xlu0 %434
        %v436 = vsub.f32 %v427, %v432
        %v437 = vsub.f32 %v428, %v435
        %v438 = vmul.f32 %v436, 1.442695
        %v439 = vpow.pop %v438
        %v440 = vmul.f32 %v437, 1.442695
        %v441 = vpow.pop %v440
        %v442 = vsel %vm429, %v439, 0.0
        %443 = vadd.xlane.f32.xlu0 %v442
        %v444 = vpop.xlane.xlu0 %443
        %v445 = vsel %vm429, %v441, 0.0
        %446 = vadd.xlane.f32.xlu0 %v445
        %v447 = vpop.xlane.xlu0 %446
        %v448 = vrcp.pop %v444
        %v449 = vrcp.pop %v447
        %v450 = vmul.f32 %v439, %v448
        %v451 = vmul.f32 %v441, %v449
        %v452 = vld [vmem:[%s2] sm:$0xff]
        %v453 = vld [vmem:[%s2 + $0x8] sm:$0xff]
        %v454 = vld [vmem:[%s3] sm:$0xff]
        %v455 = vld [vmem:[%s4] sm:$0xff]
        %456 = vmatprep.subr.mxu0 0.0
        %457 = vmatpush1.msra.mxu0 0.0
        %458 = vmatprep.subr.mxu0 0.0
        %459 = vmatpush1.msra.mxu0 0.0
        %460 = vmatprep.subr.mxu0 0.0
        %461 = vmatpush1.msra.mxu0 0.0
        %462 = vmatprep.subr.mxu0 0.0
        %463 = vmatpush1.msra.mxu0 0.0
        %464 = vmatprep.subr.mxu0 0.0
        %465 = vmatpush1.msra.mxu0 0.0
        %466 = vmatprep.subr.mxu0 0.0
        %467 = vmatpush1.msra.mxu0 0.0
        %468 = vmatprep.subr.mxu0 0.0
        %469 = vmatpush1.msra.mxu0 0.0
        %470 = vmatprep.subr.mxu0 0.0
        %471 = vmatpush1.msra.mxu0 0.0
        %472 = vmatprep.subr.mxu0 0.0
        %473 = vmatpush1.msra.mxu0 0.0
        %474 = vmatprep.subr.mxu0 0.0
        %475 = vmatpush1.msra.mxu0 0.0
        %476 = vmatprep.subr.mxu0 0.0
        %477 = vmatpush1.msra.mxu0 0.0
        %478 = vmatprep.subr.mxu0 0.0
        %479 = vmatpush1.msra.mxu0 0.0
        %480 = vmatprep.subr.mxu0 0.0
        %481 = vmatpush1.msra.mxu0 0.0
        %482 = vmatprep.subr.mxu0 0.0
        %483 = vmatpush1.msra.mxu0 0.0
        %484 = vmatprep.subr.mxu0 0.0
        %485 = vmatpush1.msra.mxu0 0.0
        %486 = vmatprep.subr.mxu0 0.0
        %487 = vmatpush1.msra.mxu0 %v455
        %488 = vmatprep.subr.mxu0 0.0
        %489 = vmatpush2.msra.mxu0 0.0
        %490 = vmatprep.subr.mxu0 0.0
        %491 = vmatpush2.msra.mxu0 0.0
        %492 = vmatprep.subr.mxu0 0.0
        %493 = vmatpush2.msra.mxu0 0.0
        %494 = vmatprep.subr.mxu0 0.0
        %495 = vmatpush2.msra.mxu0 0.0
        %496 = vmatprep.subr.mxu0 0.0
        %497 = vmatpush2.msra.mxu0 0.0
        %498 = vmatprep.subr.mxu0 0.0
        %499 = vmatpush2.msra.mxu0 0.0
        %500 = vmatprep.subr.mxu0 0.0
        %501 = vmatpush2.msra.mxu0 0.0
        %502 = vmatprep.subr.mxu0 0.0
        %503 = vmatpush2.msra.mxu0 0.0
        %504 = vmatprep.subr.mxu0 0.0
        %505 = vmatpush2.msra.mxu0 0.0
        %506 = vmatprep.subr.mxu0 0.0
        %507 = vmatpush2.msra.mxu0 0.0
        %508 = vmatprep.subr.mxu0 0.0
        %509 = vmatpush2.msra.mxu0 0.0
        %510 = vmatprep.subr.mxu0 0.0
        %511 = vmatpush2.msra.mxu0 0.0
        %512 = vmatprep.subr.mxu0 0.0
        %513 = vmatpush2.msra.mxu0 0.0
        %514 = vmatprep.subr.mxu0 0.0
        %515 = vmatpush2.msra.mxu0 0.0
        %516 = vmatprep.subr.mxu0 0.0
        %517 = vmatpush2.msra.mxu0 0.0
        %518 = vmatprep.subr.mxu0 0.0
        %519 = vmatpush2.msra.mxu0 0.0
        %520 = vmatprep.mubr.f32.mxu0 0.0
        %521 = vmatmul.mubr.f32.gmra.mxu0 %v347
        %v522 = vpop.f32.mrf.mxu0
        %v523 = vadd.f32 0.0, %v522
        %v524 = vpop.f32.mrf.mxu0
        %525 = vmatprep.mubr.f32.mxu0 0.0
        %526 = vmatmul.mubr.f32.gmra.mxu0 %v350
        %v527 = vpop.f32.mrf.mxu0
        %v528 = vadd.f32 0.0, %v527
        %v529 = vpop.f32.mrf.mxu0
        %530 = vdwg.mxu0
        %v532 = vsel %vm345, %v452, 0
        %v535 = vsel %vm345, %v453, 0
        %537 = vmatprep.subr.mxu0 0.0
        %538 = vmatpush1.msra.mxu0 0.0
        %539 = vmatprep.subr.mxu0 0.0
        %540 = vmatpush1.msra.mxu0 0.0
        %541 = vmatprep.subr.mxu0 0.0
        %542 = vmatpush1.msra.mxu0 0.0
        %543 = vmatprep.subr.mxu0 0.0
        %544 = vmatpush1.msra.mxu0 0.0
        %545 = vmatprep.subr.mxu0 0.0
        %546 = vmatpush1.msra.mxu0 0.0
        %547 = vmatprep.subr.mxu0 0.0
        %548 = vmatpush1.msra.mxu0 0.0
        %549 = vmatprep.subr.mxu0 0.0
        %550 = vmatpush1.msra.mxu0 0.0
        %551 = vmatprep.subr.mxu0 0.0
        %552 = vmatpush1.msra.mxu0 0.0
        %553 = vmatprep.subr.mxu0 0.0
        %554 = vmatpush1.msra.mxu0 0.0
        %555 = vmatprep.subr.mxu0 0.0
        %556 = vmatpush1.msra.mxu0 0.0
        %557 = vmatprep.subr.mxu0 0.0
        %558 = vmatpush1.msra.mxu0 0.0
        %559 = vmatprep.subr.mxu0 0.0
        %560 = vmatpush1.msra.mxu0 0.0
        %561 = vmatprep.subr.mxu0 0.0
        %562 = vmatpush1.msra.mxu0 0.0
        %563 = vmatprep.subr.mxu0 0.0
        %564 = vmatpush1.msra.mxu0 0.0
        %565 = vmatprep.subr.mxu0 0.0
        %566 = vmatpush1.msra.mxu0 0.0
        %567 = vmatprep.subr.mxu0 0.0
        %568 = vmatpush1.msra.mxu0 %v454
        %569 = vmatprep.subr.mxu0 0.0
        %570 = vmatpush2.msra.mxu0 0.0
        %571 = vmatprep.subr.mxu0 0.0
        %572 = vmatpush2.msra.mxu0 0.0
        %573 = vmatprep.subr.mxu0 0.0
        %574 = vmatpush2.msra.mxu0 0.0
        %575 = vmatprep.subr.mxu0 0.0
        %576 = vmatpush2.msra.mxu0 0.0
        %577 = vmatprep.subr.mxu0 0.0
        %578 = vmatpush2.msra.mxu0 0.0
        %579 = vmatprep.subr.mxu0 0.0
        %580 = vmatpush2.msra.mxu0 0.0
        %581 = vmatprep.subr.mxu0 0.0
        %582 = vmatpush2.msra.mxu0 0.0
        %583 = vmatprep.subr.mxu0 0.0
        %584 = vmatpush2.msra.mxu0 0.0
        %585 = vmatprep.subr.mxu0 0.0
        %586 = vmatpush2.msra.mxu0 0.0
        %587 = vmatprep.subr.mxu0 0.0
        %588 = vmatpush2.msra.mxu0 0.0
        %589 = vmatprep.subr.mxu0 0.0
        %590 = vmatpush2.msra.mxu0 0.0
        %591 = vmatprep.subr.mxu0 0.0
        %592 = vmatpush2.msra.mxu0 0.0
        %593 = vmatprep.subr.mxu0 0.0
        %594 = vmatpush2.msra.mxu0 0.0
        %595 = vmatprep.subr.mxu0 0.0
        %596 = vmatpush2.msra.mxu0 0.0
        %597 = vmatprep.subr.mxu0 0.0
        %598 = vmatpush2.msra.mxu0 0.0
        %599 = vmatprep.subr.mxu0 0.0
        %600 = vmatpush2.msra.mxu0 0.0
        %601 = vmatprep.mubr.f32.mxu0 0.0
        %602 = vmatmul.mubr.f32.gmra.mxu0 %v532
        %v603 = vpop.f32.mrf.mxu0
        %v604 = vadd.f32 %v523, %v603
        %v605 = vpop.f32.mrf.mxu0
        %606 = vmatprep.mubr.f32.mxu0 0.0
        %607 = vmatmul.mubr.f32.gmra.mxu0 %v535
        %v608 = vpop.f32.mrf.mxu0
        %v609 = vadd.f32 %v528, %v608
        %v610 = vpop.f32.mrf.mxu0
        %611 = vdwg.mxu0
        %v612 = vld [vmem:[%s5] sm:$0xff]
        %v613 = vld [vmem:[%s5 + $0x8] sm:$0xff]
        %615 = vset.pattern.permute.xlu0 0
        %616 = vperm.xlu0 %615, %v612
        %v617 = vpop.permute.xlu0 %616
        %620 = vset.pattern.permute.xlu0 0
        %621 = vperm.xlu0 %620, %v613
        %v622 = vpop.permute.xlu0 %621
        %v624 = vmul.f32 %v604, %v617
        %v625 = vmul.f32 %v609, %v622
        %v626 = vld [vmem:[%s6] sm:$0xff]
        %v627 = vld [vmem:[%s6 + $0x8] sm:$0xff]
        %629 = vset.pattern.permute.xlu0 0
        %630 = vperm.xlu0 %629, %v626
        %v631 = vpop.permute.xlu0 %630
        %634 = vset.pattern.permute.xlu0 0
        %635 = vperm.xlu0 %634, %v627
        %v636 = vpop.permute.xlu0 %635
        %v638 = vadd.f32 %v624, %v631
        %v639 = vadd.f32 %v625, %v636
        %v640 = vadd.f32 %v638, 3.0
        %v641 = vadd.f32 %v639, 3.0
        %v642 = vxor.u32 %v640, 2147483648
        %v643 = vxor.u32 %v641, 2147483648
        %v644 = vmul.f32 %v642, 1.442695
        %v645 = vpow.pop %v644
        %v646 = vmul.f32 %v643, 1.442695
        %v647 = vpow.pop %v646
        %v648 = vadd.f32 %v645, 1.0
        %v649 = vadd.f32 %v647, 1.0
        %v650 = vrcp.pop %v648
        %v651 = vmul.f32 1.0, %v650
        %v652 = vrcp.pop %v649
        %v653 = vmul.f32 1.0, %v652
        %v654 = vmul.f32 %v651, 1.2
        %v655 = vmul.f32 %v653, 1.2
        %v656 = vadd.f32 %v654, -0.2
        %v657 = vadd.f32 %v655, -0.2
        %v658 = vmax.f32 %v656, 0.0
        %v659 = vmax.f32 %v657, 0.0
        %v660 = vmin.f32 %v658, 1.0
        %v661 = vmin.f32 %v659, 1.0
        %vm662 = vcmp.gt.f32.partialorder %v660, 0.5
        %vm663 = vcmp.gt.f32.partialorder %v661, 0.5
        %v664 = vsel %vm662, 1.0, 0.0
        %v665 = vsel %vm663, 1.0, 0.0
        %666 = vst.msk [vmem:[%s307] sm:$0xff] %vm429, %v664
        %667 = vst.msk [vmem:[%s307 + $0x8] sm:$0xff] %vm429, %v665
        %v668 = vld [vmem:[%s0] sm:$0xff]
        %v669 = vld [vmem:[%s0 + $0x8] sm:$0xff]
        %v670 = vadd.f32 %v668, %v450
        %v671 = vadd.f32 %v669, %v451
        %v672 = vmul.f32 %v670, 0.5
        %v673 = vmul.f32 %v671, 0.5
        %v674 = vmul.f32 %v672, %v664
        %v675 = vmul.f32 %v673, %v665
        %676 = vst.msk [vmem:[%s300] sm:$0xff] %vm429, %v674
        %677 = vst.msk [vmem:[%s300 + $0x8] sm:$0xff] %vm429, %v675
        %s678 = sand.u32 %s186, 1
        %s679 = scalar_lea.sflag [#allocation3], %s678
        %s680 = sand.u32 %s186, 1
        %s681 = smul.addr %s680, 16
        %s682 = scalar_lea.vmem [#allocation2], %s681
        %s683 = sand.u32 %s212, 1
        %s684 = scalar_lea.sflag [#allocation5], %s683
        %s685 = sand.u32 %s212, 1
        %s686 = smul.addr %s685, 16
        %s687 = scalar_lea.vmem [#allocation4], %s686
        // Predicated region
        $region49: #{tpu_custom_call.1} parent=47 // pred_check
          %p688 = pneg %p196
        $region50: #{tpu_custom_call.1} parent=47 // pred_check_branch
          %690 = sbr.rel (%p688) target = $region52
        $region51: #{tpu_custom_call.1} parent=47 // pred_region
          %s692 = ssub.s32 256, 256
          %693 = vsyncadd %s679, %s692
          %s694 = smul.addr %s26, 2
          %s695 = smul.addr %s694, 128
          %s696 = scalar_lea.hbm %s7, %s695
          %s697 = sshll.u32 %s682, 4
          %s698 = int_to_ptr.vmem [resolvable:$true] %s697
          %703 = dma.vmem_to_hbm [thread:$0]  %s698, 256, %s696, %s679, 128, 128, 8
        $region52: #{tpu_custom_call.1} parent=47 // pred_fallthru
          _
        // Predicated region
        $region53: #{tpu_custom_call.1} parent=47 // pred_check
          %p704 = pneg %p222
        $region54: #{tpu_custom_call.1} parent=47 // pred_check_branch
          %706 = sbr.rel (%p704) target = $region56
        $region55: #{tpu_custom_call.1} parent=47 // pred_region
          %s708 = ssub.s32 256, 256
          %709 = vsyncadd %s684, %s708
          %s710 = smul.addr %s26, 2
          %s711 = smul.addr %s710, 128
          %s712 = scalar_lea.hbm %s8, %s711
          %s713 = sshll.u32 %s687, 4
          %s714 = int_to_ptr.vmem [resolvable:$true] %s713
          %719 = dma.vmem_to_hbm [thread:$0]  %s714, 256, %s712, %s684, 128, 128, 8
        $region56: #{tpu_custom_call.1} parent=47 // pred_fallthru
          _
      $region48: #{tpu_custom_call.1} parent=5 // pred_fallthru
        _
      %p720 = scmp.le.s32.totalorder 2, %s21
      // Predicated region
      $region57: #{tpu_custom_call.1} parent=5 // pred_check
        %p721 = pneg %p720
      $region58: #{tpu_custom_call.1} parent=5 // pred_check_branch
        %723 = sbr.rel (%p721) target = $region60
      $region59: #{tpu_custom_call.1} parent=5 // pred_region
        %s724 = ssub.s32 %s21, 2
        // Predicated region
        $region61: #{tpu_custom_call.1} parent=59 // pred_check
          %p725 = pneg %p202
        $region62: #{tpu_custom_call.1} parent=59 // pred_check_branch
          %727 = sbr.rel (%p725) target = $region64
        $region63: #{tpu_custom_call.1} parent=59 // pred_region
          %s728 = sand.u32 %s187, 1
          %s729 = scalar_lea.sflag [#allocation3], %s728
          %s730 = sand.u32 %s187, 1
          %s731 = smul.addr %s730, 16
          %s732 = scalar_lea.vmem [#allocation2], %s731
          %733 = dma.done %s729, 256
        $region64: #{tpu_custom_call.1} parent=59 // pred_fallthru
          _
        // Predicated region
        $region65: #{tpu_custom_call.1} parent=59 // pred_check
          %p734 = pneg %p228
        $region66: #{tpu_custom_call.1} parent=59 // pred_check_branch
          %736 = sbr.rel (%p734) target = $region68
        $region67: #{tpu_custom_call.1} parent=59 // pred_region
          %s737 = sand.u32 %s213, 1
          %s738 = scalar_lea.sflag [#allocation5], %s737
          %s739 = sand.u32 %s213, 1
          %s740 = smul.addr %s739, 16
          %s741 = scalar_lea.vmem [#allocation4], %s740
          %742 = dma.done %s738, 256
        $region68: #{tpu_custom_call.1} parent=59 // pred_fallthru
          _
      $region60: #{tpu_custom_call.1} parent=5 // pred_fallthru
        _
    $region6: #{tpu_custom_call.1} parent=1 // loop_footer
      %s25 = sadd.s32 1, %s21
    $region7: #{tpu_custom_call.1} parent=1 // loop_footer_branch
      %20 = sbr.rel target = $region3
    $region8: #{tpu_custom_call.1} parent=1 // loop_exit
      _
    %743 = vsyncpa [#allocation3], 1
    %s744 = scalar_lea.sflag [#allocation3], 1
    %745 = vsyncpa %s744, 1
    %746 = vsyncpa [#allocation5], 1
    %s747 = scalar_lea.sflag [#allocation5], 1
    %748 = vsyncpa %s747, 1

</llo_original>
